<compile_context>
chip_gen: v7x
topology: tpu7x:2x2x1
jax: 0.10.0
libtpu: 0.0.40
codegen_flags: <defaults>
</compile_context>

<pallas_src>
import numpy as np
import jax
import jax.numpy as jnp
from jax.experimental import pallas as pl
from jax.experimental.pallas import tpu as pltpu


def _droppath_kernel(scale_ref, x_ref, o_ref):
    # scale_ref: (TB, 1) per-row scale = bernoulli(keep_prob) / keep_prob,
    # already in x's dtype.  Steady state = one broadcast multiply per tile.
    o_ref[...] = x_ref[...] * scale_ref[...]


def drop_path(x, *, p: float = 0.0, training: bool = False, key=None):
    """DropPath forward. x: [B, ...]. Identity unless (training and p > 0)."""
    if (not training) or p <= 0.0:
        return x                      # exactly what the torch module does
    assert 0.0 < p < 1.0, "drop probability must be in (0, 1)"
    keep_prob = 1.0 - p
    if key is None:
        key = jax.random.PRNGKey(0)

    orig_shape = x.shape
    B = orig_shape[0]
    F = int(np.prod(orig_shape[1:])) if len(orig_shape) > 1 else 1
    x2 = x.reshape(B, F)

    # One Bernoulli(keep_prob) decision per sample, folded with 1/keep_prob so
    # the kernel only multiplies.  Computed once per call (hoisted out of the
    # feature loop), cast to x.dtype so the kernel stays in the native dtype.
    mask = jax.random.bernoulli(key, p=keep_prob, shape=(B, 1))
    row_scale = (mask.astype(jnp.float32) * jnp.float32(1.0 / keep_prob)).astype(x.dtype)

    # Tile selection: lane-dense feature tiles, capped so one tile is <= ~8 MiB
    # (f32) and the double-buffered footprint (2x in + 2x out) stays well under
    # v7x's 64 MiB VMEM.  When capped, TF is a multiple of 128 and TB of 8;
    # Pallas handles ragged edges for non-divisible B / F.
    TF_CAP, TB_CAP = 4096, 512
    TF = F if F <= TF_CAP else TF_CAP
    TB = B if B <= TB_CAP else TB_CAP
    grid = (pl.cdiv(B, TB), pl.cdiv(F, TF))

    itemsize = jnp.dtype(x.dtype).itemsize
    out = pl.pallas_call(
        _droppath_kernel,
        out_shape=jax.ShapeDtypeStruct((B, F), x.dtype),
        grid_spec=pltpu.PrefetchScalarGridSpec(
            num_scalar_prefetch=0,
            grid=grid,
            in_specs=[
                pl.BlockSpec((TB, 1), lambda i, j: (i, 0)),    # per-row scale
                pl.BlockSpec((TB, TF), lambda i, j: (i, j)),   # x tile
            ],
            out_specs=pl.BlockSpec((TB, TF), lambda i, j: (i, j)),
        ),
        compiler_params=pltpu.CompilerParams(
            dimension_semantics=("parallel", "parallel"),
            vmem_limit_bytes=48 * 1024 * 1024,   # 4 x 8 MiB buffers + headroom, < 64 MiB (v7x)
        ),
        cost_estimate=pl.CostEstimate(
            flops=B * F,                                   # one multiply per element
            transcendentals=0,
            bytes_accessed=2 * B * F * itemsize + B * itemsize,
        ),
    )(row_scale, x2)

    return out.reshape(orig_shape)


if __name__ == "__main__":
    B, C, H, W = 8, 4, 16, 16        # F = C*H*W = 1024 -> lane-dense tiles
    root = jax.random.PRNGKey(0)
    kx, kmask = jax.random.split(root)
    x = jax.random.normal(kx, (B, C, H, W), dtype=jnp.float32)

    # 1) Eval mode (or p == 0): identity, same as the torch module.
    out_eval = jax.block_until_ready(drop_path(x, p=0.3, training=False))
    assert out_eval.shape == x.shape
    assert jnp.array_equal(out_eval, x), "eval-mode DropPath must be identity"

    # 2) Training mode with p > 0: per-sample drop-or-scale via the Pallas kernel.
    p = 0.5
    keep_prob = 1.0 - p
    out = jax.block_until_ready(drop_path(x, p=p, training=True, key=kmask))
    assert out.shape == x.shape

    x2 = x.reshape(B, -1)
    o2 = out.reshape(B, -1)
    scaled = x2 / keep_prob
    # Every row must be either entirely dropped (zeros) or equal to x / keep_prob.
    row_dropped = jnp.all(o2 == 0.0, axis=1)
    row_kept = jnp.all(jnp.abs(o2 - scaled) <= 1e-5 * (1.0 + jnp.abs(scaled)), axis=1)
    assert bool(jnp.all(row_dropped | row_kept)), (
        "each sample must be either zeroed or scaled by 1/keep_prob"
    )

    # Cross-check against the exact mask the wrapper drew.
    mask = jax.random.bernoulli(kmask, p=keep_prob, shape=(B, 1)).astype(jnp.float32)
    expected = x2 * (mask / keep_prob)
    assert jnp.allclose(o2, expected, atol=1e-6), "kernel must match reference mask math"

    print("KERNEL_OK")
</pallas_src>

<mosaic_0001>
module attributes {stable_mosaic.version = 11 : i64} {
  func.func @_droppath_kernel(%arg0: i32, %arg1: i32, %arg2: memref<8x1xf32, #tpu.memory_space<vmem>>, %arg3: memref<8x1024xf32, #tpu.memory_space<vmem>>, %arg4: memref<8x1024xf32, #tpu.memory_space<vmem>>) attributes {dimension_semantics = [#tpu.dimension_semantics<parallel>, #tpu.dimension_semantics<parallel>], iteration_bounds = array<i64: 1, 1>, scalar_prefetch = 0 : i64, scratch_operands = 0 : i64, tpu.core_type = #tpu.core_type<tc>, window_params = [{transform_indices = @transform_0, window_bounds = array<i64: 8, 1>}, {transform_indices = @transform_1, window_bounds = array<i64: 8, 1024>}, {transform_indices = @transform_2, window_bounds = array<i64: 8, 1024>}]} {
    %c0 = arith.constant 0 : index
    %c0_0 = arith.constant 0 : index
    %0 = vector.load %arg3[%c0, %c0_0] : memref<8x1024xf32, #tpu.memory_space<vmem>>, vector<8x1024xf32>
    %c0_1 = arith.constant 0 : index
    %c0_2 = arith.constant 0 : index
    %1 = vector.load %arg2[%c0_1, %c0_2] : memref<8x1xf32, #tpu.memory_space<vmem>>, vector<8x1xf32>
    %2 = vector.broadcast %1 : vector<8x1xf32> to vector<8x1024xf32>
    %3 = arith.mulf %0, %2 : vector<8x1024xf32>
    %c0_3 = arith.constant 0 : index
    %c0_4 = arith.constant 0 : index
    %4 = vector.load %arg4[%c0_3, %c0_4] : memref<8x1024xf32, #tpu.memory_space<vmem>>, vector<8x1024xf32>
    tpu.vector_store %arg4[%c0_3, %c0_4], %3 {strides = array<i32>} : memref<8x1024xf32, #tpu.memory_space<vmem>>, vector<8x1024xf32>,
    return
  }
  func.func @transform_0(%arg0: i32, %arg1: i32) -> (i32, i32) {
    %c0_i32 = arith.constant 0 : i32
    %c0_i32_0 = arith.constant 0 : i32
    return %arg0, %c0_i32 : i32, i32
  }
  func.func @transform_1(%arg0: i32, %arg1: i32) -> (i32, i32) {
    %c0_i32 = arith.constant 0 : i32
    return %arg0, %arg1 : i32, i32
  }
  func.func @transform_2(%arg0: i32, %arg1: i32) -> (i32, i32) {
    %c0_i32 = arith.constant 0 : i32
    return %arg0, %arg1 : i32, i32
  }
}

</mosaic_0001>

<llo_original>
// kernel: tpu_custom_call.1
$region0: #{tpu_custom_call.1}
  #allocation0 [shape = 'u32[]', space=smem, size = 0x4, offset = 0x4, fixed_abs, tag = 'smem constant byte address 0x4 - core index']
  #allocation1 [shape = 'u32[144,128]{1,0:T(1,128)}', space=vmem, size = 0x12000, scoped, tag = 'internal scratch']
  %s0 = inlined_call_operand.vmem [shape: f32[8,1], index: 0, kind: input, shape index: {}]
  %s1 = inlined_call_operand.hbm [shape: f32[8,1024], index: 1, kind: input, shape index: {}]
  %s2 = inlined_call_operand.hbm [shape: f32[8,1024], index: 2, kind: output, shape index: {}]
  %s3 = sld [smem:[#allocation0]]
  $region22: #{tpu_custom_call.1} parent=0
    _
  %s5 = ssub.s32 1, %s3
  %s6 = scalar_select 0, %s5, %s3
  $region1: #{tpu_custom_call.1} parent=0
    #allocation2 [shape = 'u8[32768]{0}', space=vmem, size = 0x8000, scoped, tag = 'input window, operand 1, single buffered']
    #allocation3 [shape = 's32[1]{0}', space=sflag, size = 0x4, scoped, tag = 'scoped memory for tpu_custom_call.1']
    #allocation4 [shape = 's32[1]{0}', space=sflag, size = 0x4, scoped, tag = 'scoped memory for tpu_custom_call.1']
    #allocation5 [shape = 'u8[32768]{0}', space=vmem, size = 0x8000, scoped, tag = 'output window, operand 0, single buffered']
    %7 = vsyncpa [#allocation3], 0
    %8 = vsyncpa [#allocation4], 0
    // Predicated region
    $region2: #{tpu_custom_call.1} parent=1 // pred_check
      _
    $region3: #{tpu_custom_call.1} parent=1 // pred_check_branch
      %10 = sbr.rel (0) target = $region5
    $region4: #{tpu_custom_call.1} parent=1 // pred_region
      _
    $region5: #{tpu_custom_call.1} parent=1 // pred_fallthru
      _
    // Predicated region
    $region6: #{tpu_custom_call.1} parent=1 // pred_check
      _
    $region7: #{tpu_custom_call.1} parent=1 // pred_check_branch
      %12 = sbr.rel (0) target = $region9
    $region8: #{tpu_custom_call.1} parent=1 // pred_region
      %s14 = ssub.s32 1024, 1024
      %15 = vsyncadd [#allocation3], %s14
      %s17 = sshll.u32 [#allocation2], 4
      %s18 = int_to_ptr.vmem [resolvable:$true] %s17
      %20 = dma.hbm_to_vmem [thread:$0]  %s1, 1024, %s18, [#allocation3]
    $region9: #{tpu_custom_call.1} parent=1 // pred_fallthru
      _
    // Predicated region
    $region10: #{tpu_custom_call.1} parent=1 // pred_check
      _
    $region11: #{tpu_custom_call.1} parent=1 // pred_check_branch
      %22 = sbr.rel (0) target = $region13
    $region12: #{tpu_custom_call.1} parent=1 // pred_region
      %23 = dma.done [#allocation3], 1024
    $region13: #{tpu_custom_call.1} parent=1 // pred_fallthru
      _
    %v24 = vld [vmem:[#allocation2] sm:$0xff]
    %v25 = vld [vmem:[#allocation2 + $0x8] sm:$0xff]
    %v26 = vld [vmem:[#allocation2 + $0x10] sm:$0xff]
    %v27 = vld [vmem:[#allocation2 + $0x18] sm:$0xff]
    %v28 = vld [vmem:[#allocation2 + $0x20] sm:$0xff]
    %v29 = vld [vmem:[#allocation2 + $0x28] sm:$0xff]
    %v30 = vld [vmem:[#allocation2 + $0x30] sm:$0xff]
    %v31 = vld [vmem:[#allocation2 + $0x38] sm:$0xff]
    %v32 = vld [vmem:[%s0] sm:$0xff]
    %34 = vset.pattern.permute.xlu0 0
    %35 = vperm.xlu0 %34, %v32
    %v36 = vpop.permute.xlu0 %35
    %v38 = vmul.f32 %v24, %v36
    %v39 = vmul.f32 %v25, %v36
    %v40 = vmul.f32 %v26, %v36
    %v41 = vmul.f32 %v27, %v36
    %v42 = vmul.f32 %v28, %v36
    %v43 = vmul.f32 %v29, %v36
    %v44 = vmul.f32 %v30, %v36
    %v45 = vmul.f32 %v31, %v36
    %46 = vst [vmem:[#allocation5] sm:$0xff] %v38
    %47 = vst [vmem:[#allocation5 + $0x8] sm:$0xff] %v39
    %48 = vst [vmem:[#allocation5 + $0x10] sm:$0xff] %v40
    %49 = vst [vmem:[#allocation5 + $0x18] sm:$0xff] %v41
    %50 = vst [vmem:[#allocation5 + $0x20] sm:$0xff] %v42
    %51 = vst [vmem:[#allocation5 + $0x28] sm:$0xff] %v43
    %52 = vst [vmem:[#allocation5 + $0x30] sm:$0xff] %v44
    %53 = vst [vmem:[#allocation5 + $0x38] sm:$0xff] %v45
    // Predicated region
    $region14: #{tpu_custom_call.1} parent=1 // pred_check
      _
    $region15: #{tpu_custom_call.1} parent=1 // pred_check_branch
      %55 = sbr.rel (0) target = $region17
    $region16: #{tpu_custom_call.1} parent=1 // pred_region
      %s57 = ssub.s32 1024, 1024
      %58 = vsyncadd [#allocation4], %s57
      %s60 = sshll.u32 [#allocation5], 4
      %s61 = int_to_ptr.vmem [resolvable:$true] %s60
      %63 = dma.vmem_to_hbm [thread:$0]  %s61, 1024, %s2, [#allocation4]
    $region17: #{tpu_custom_call.1} parent=1 // pred_fallthru
      _
    // Predicated region
    $region18: #{tpu_custom_call.1} parent=1 // pred_check
      _
    $region19: #{tpu_custom_call.1} parent=1 // pred_check_branch
      %65 = sbr.rel (0) target = $region21
    $region20: #{tpu_custom_call.1} parent=1 // pred_region
      %66 = dma.done [#allocation4], 1024
    $region21: #{tpu_custom_call.1} parent=1 // pred_fallthru
      _
    %67 = vsyncpa [#allocation3], 1
    %68 = vsyncpa [#allocation4], 1

</llo_original>
